<compile_context>
chip_gen: v6e
topology: v6e:2x2x1
jax: 0.10.0
libtpu: 0.0.40
codegen_flags: <defaults>
</compile_context>

<pallas_src>
import functools

import jax
import jax.numpy as jnp
from jax import lax
from jax.experimental import pallas as pl
from jax.experimental.pallas import tpu as pltpu


def _round_up(x: int, m: int) -> int:
    return ((x + m - 1) // m) * m


def _related_embeddings_kernel(ids_ref, emb_ref, out_ref, acc_ref, *, v_chunk):
    """One grid step == (one batch tile i) x (one vocab tile k).

    ids_ref : VMEM (TB, S)  int32    -- token ids for batch tile i (same block for all k)
    emb_ref : VMEM (VT, D)  f32/bf16 -- vocab tile k of the embedding table
    out_ref : VMEM (TB, D)  f32      -- mean embedding (written at the last k)
    acc_ref : VMEM (TB, D)  f32      -- partial-sum accumulator across vocab tiles
    """
    k = pl.program_id(1)

    @pl.when(k == 0)
    def _init():
        acc_ref[...] = jnp.zeros_like(acc_ref)

    tb, s = ids_ref.shape
    vt, d = emb_ref.shape

    ids = ids_ref[...]                                   # (TB, S) int32
    toks = [ids[:, j:j + 1] for j in range(s)]           # static S, (TB, 1) each
    base = k * vt                                        # vocab offset of tile k
    iota = lax.broadcasted_iota(jnp.int32, (tb, v_chunk), 1)  # hoisted (anti-CSE)

    partial = jnp.zeros((tb, d), jnp.float32)
    for c in range(vt // v_chunk):                       # static unroll over lane chunks
        lane = iota + (base + c * v_chunk)               # global vocab id per lane
        cnt = jnp.zeros((tb, v_chunk), jnp.int32)
        for tok in toks:                                 # register-resident accumulation
            cnt = cnt + (lane == tok).astype(jnp.int32)
        counts = cnt.astype(emb_ref.dtype)               # exact small ints (<= S)
        partial = partial + jnp.dot(
            counts, emb_ref[pl.ds(c * v_chunk, v_chunk), :],
            preferred_element_type=jnp.float32)

    acc_ref[...] += partial

    @pl.when(k == pl.num_programs(1) - 1)
    def _finalize():
        out_ref[...] = (acc_ref[...] * (1.0 / s)).astype(out_ref.dtype)


def related_embeddings_forward(
    input_ids: jax.Array,
    emb_table: jax.Array,
    *,
    batch_tile: int | None = None,
    vocab_tile: int | None = None,
    table_dtype=None,
) -> jax.Array:
    """input_ids: (B, S) integer ids; emb_table: (V, D) -> (B, D) float32.

    Notes:
      * Out-of-range token ids contribute zero to the mean (the one-hot
        matches nothing) instead of raising like PyTorch; validate upstream
        if strict error semantics are required.
      * table_dtype=jnp.bfloat16 halves table VMEM residency and uses the
        fast MXU path; counts stay exact, accumulation stays f32.
    """
    B, S = input_ids.shape
    V, D = emb_table.shape

    input_ids = input_ids.astype(jnp.int32)
    if table_dtype is not None and emb_table.dtype != jnp.dtype(table_dtype):
        emb_table = emb_table.astype(table_dtype)

    # ---- batch tiling ------------------------------------------------------
    b8 = _round_up(B, 8)
    if batch_tile is None:
        TB = min(128, b8)
        # Keep >= 2 batch tiles when possible so dimension_semantics can shard
        # the "parallel" axis across the two TensorCores on v7x (no-op on
        # single-TC v5e/v6e).
        if b8 >= 16 and b8 // TB < 2:
            TB = min(TB, _round_up(b8 // 2, 8))
    else:
        TB = max(8, min(_round_up(batch_tile, 8), b8))
    B_pad = _round_up(B, TB)
    if B_pad != B:   # padded rows use token 0 (valid id) and are sliced off below
        input_ids = jnp.pad(input_ids, ((0, B_pad - B), (0, 0)))

    # ---- vocab tiling (bounds VMEM independent of vocabulary size) ----------
    v128 = _round_up(V, 128)
    VT = min(512, v128) if vocab_tile is None else min(_round_up(vocab_tile, 128), v128)
    V_pad = _round_up(V, VT)
    if V_pad != V:   # padded vocab rows are zero and never matched by any id
        emb_table = jnp.pad(emb_table, ((0, V_pad - V), (0, 0)))
    num_vtiles = V_pad // VT
    v_chunk = min(128, VT)

    grid = (B_pad // TB, num_vtiles)
    itab = jnp.dtype(emb_table.dtype).itemsize

    # VMEM budget: streamed table tile (double-buffered so its DMA overlaps the
    # MXU; footprint bounded by 2*VT*D) + ids/out blocks + accumulator scratch
    # + headroom, capped by this chip's physical VMEM (only 64 MiB on v7x).
    need = (2 * VT * D * itab
            + 2 * TB * S * 4
            + 2 * TB * D * 4
            + TB * D * 4
            + (4 << 20))
    try:
        phys = pltpu.get_tpu_info().vmem_capacity_bytes
    except Exception:
        phys = 64 << 20                 # conservative: smallest (v7x) VMEM
    cap = max(phys - (8 << 20), 16 << 20)
    vmem_limit = int(min(max(need, 32 << 20), cap))

    grid_spec = pltpu.PrefetchScalarGridSpec(
        num_scalar_prefetch=0,
        grid=grid,
        in_specs=[
            # Token ids for batch tile i; block index is constant across k, so
            # the tiny ids block is fetched once per batch tile, not per vocab tile.
            pl.BlockSpec((TB, S), lambda i, k: (i, 0)),
            # Streamed (VT, D) vocab tile of the embedding table.
            pl.BlockSpec((VT, D), lambda i, k: (k, 0)),
        ],
        out_specs=pl.BlockSpec((TB, D), lambda i, k: (i, 0)),
        scratch_shapes=[pltpu.VMEM((TB, D), jnp.float32)],
    )

    out = pl.pallas_call(
        functools.partial(_related_embeddings_kernel, v_chunk=v_chunk),
        out_shape=jax.ShapeDtypeStruct((B_pad, D), jnp.float32),
        grid_spec=grid_spec,
        compiler_params=pltpu.CompilerParams(
            # Batch tiles are independent; the vocab axis is a sequential reduction.
            dimension_semantics=("parallel", "arbitrary"),
            vmem_limit_bytes=vmem_limit,
        ),
    )(input_ids, emb_table)

    return out[:B]


if __name__ == "__main__":
    # Small, deterministic synthetic setup (no checkpoint load).
    VOCAB = 300        # number of words with relatedness rows
    NUM_LABELS = 128   # embedding dim (= number of labels), lane-friendly
    BATCH = 24
    SEQ = 6

    key = jax.random.PRNGKey(0)
    k_emb, k_ids = jax.random.split(key)

    # Deterministic "pretrained" relatedness embedding table.
    emb_table = jax.random.normal(k_emb, (VOCAB, NUM_LABELS), dtype=jnp.float32)
    input_ids = jax.random.randint(k_ids, (BATCH, SEQ), 0, VOCAB, dtype=jnp.int32)

    # Pure-JAX reference of the PyTorch forward.
    ref = jnp.mean(emb_table[input_ids], axis=1)

    # 1) f32 path with small explicit tiles: exercises multiple batch tiles AND
    #    the streamed-vocab accumulation path (3 vocab tiles of 128).
    out = related_embeddings_forward(input_ids, emb_table,
                                     batch_tile=16, vocab_tile=128)
    out = jax.block_until_ready(out)
    assert out.shape == (BATCH, NUM_LABELS), out.shape
    assert jnp.allclose(out, ref, atol=1e-5, rtol=1e-5), "f32 mismatch vs reference"

    # 2) Default (performance) tiling with a bf16 table: counts remain exact,
    #    only the table rounds, accumulation stays f32.
    out_bf16 = related_embeddings_forward(input_ids, emb_table,
                                          table_dtype=jnp.bfloat16)
    out_bf16 = jax.block_until_ready(out_bf16)
    assert out_bf16.shape == (BATCH, NUM_LABELS), out_bf16.shape
    assert jnp.allclose(out_bf16, ref, atol=2e-2, rtol=2e-2), "bf16 mismatch vs reference"

    print("KERNEL_OK")
</pallas_src>

<mosaic_0001>
module attributes {stable_mosaic.version = 11 : i64} {
  func.func @_related_embeddings_kernel(%arg0: i32, %arg1: i32, %arg2: memref<16x6xi32, #tpu.memory_space<vmem>>, %arg3: memref<128x128xf32, #tpu.memory_space<vmem>>, %arg4: memref<16x128xf32, #tpu.memory_space<vmem>>, %arg5: memref<16x128xf32, #tpu.memory_space<vmem>>) attributes {dimension_semantics = [#tpu.dimension_semantics<parallel>, #tpu.dimension_semantics<arbitrary>], iteration_bounds = array<i64: 2, 3>, scalar_prefetch = 0 : i64, scratch_operands = 1 : i64, tpu.core_type = #tpu.core_type<tc>, window_params = [{transform_indices = @transform_0, window_bounds = array<i64: 16, 6>}, {transform_indices = @transform_1, window_bounds = array<i64: 128, 128>}, {transform_indices = @transform_2, window_bounds = array<i64: 16, 128>}]} {
    %c0_i32 = arith.constant 0 : i32
    %0 = arith.cmpi eq, %arg1, %c0_i32 : i32
    %1 = arith.extui %0 : i1 to i32
    %c0_i32_0 = arith.constant 0 : i32
    %2 = arith.cmpi ne, %1, %c0_i32_0 : i32
    scf.if %2 {
      %cst_12 = arith.constant 0.000000e+00 : f32
      %51 = vector.broadcast %cst_12 : f32 to vector<16x128xf32>
      %c0_13 = arith.constant 0 : index
      %c0_14 = arith.constant 0 : index
      %52 = vector.load %arg5[%c0_13, %c0_14] : memref<16x128xf32, #tpu.memory_space<vmem>>, vector<16x128xf32>
      tpu.vector_store %arg5[%c0_13, %c0_14], %51 {strides = array<i32>} : memref<16x128xf32, #tpu.memory_space<vmem>>, vector<16x128xf32>,
    } else {
    }
    %c0 = arith.constant 0 : index
    %c0_1 = arith.constant 0 : index
    %3 = vector.load %arg2[%c0, %c0_1] : memref<16x6xi32, #tpu.memory_space<vmem>>, vector<16x6xi32>
    %4 = vector.extract_strided_slice %3 {offsets = [0, 0], sizes = [16, 1], strides = [1, 1]} : vector<16x6xi32> to vector<16x1xi32>
    %5 = vector.extract_strided_slice %3 {offsets = [0, 1], sizes = [16, 1], strides = [1, 1]} : vector<16x6xi32> to vector<16x1xi32>
    %6 = vector.extract_strided_slice %3 {offsets = [0, 2], sizes = [16, 1], strides = [1, 1]} : vector<16x6xi32> to vector<16x1xi32>
    %7 = vector.extract_strided_slice %3 {offsets = [0, 3], sizes = [16, 1], strides = [1, 1]} : vector<16x6xi32> to vector<16x1xi32>
    %8 = vector.extract_strided_slice %3 {offsets = [0, 4], sizes = [16, 1], strides = [1, 1]} : vector<16x6xi32> to vector<16x1xi32>
    %9 = vector.extract_strided_slice %3 {offsets = [0, 5], sizes = [16, 1], strides = [1, 1]} : vector<16x6xi32> to vector<16x1xi32>
    %c128_i32 = arith.constant 128 : i32
    %10 = arith.muli %arg1, %c128_i32 : i32
    %11 = tpu.iota {dimensions = array<i32: 1>} : vector<16x128xi32>
    %cst = arith.constant 0.000000e+00 : f32
    %12 = vector.broadcast %cst : f32 to vector<16x128xf32>
    %c0_i32_2 = arith.constant 0 : i32
    %13 = arith.addi %10, %c0_i32_2 : i32
    %14 = vector.broadcast %13 : i32 to vector<16x128xi32>
    %15 = arith.addi %11, %14 : vector<16x128xi32>
    %c0_i32_3 = arith.constant 0 : i32
    %16 = vector.broadcast %c0_i32_3 : i32 to vector<16x128xi32>
    %17 = vector.broadcast %4 : vector<16x1xi32> to vector<16x128xi32>
    %18 = arith.cmpi eq, %15, %17 : vector<16x128xi32>
    %19 = arith.extui %18 : vector<16x128xi1> to vector<16x128xi32>
    %20 = arith.addi %16, %19 : vector<16x128xi32>
    %21 = vector.broadcast %5 : vector<16x1xi32> to vector<16x128xi32>
    %22 = arith.cmpi eq, %15, %21 : vector<16x128xi32>
    %23 = arith.extui %22 : vector<16x128xi1> to vector<16x128xi32>
    %24 = arith.addi %20, %23 : vector<16x128xi32>
    %25 = vector.broadcast %6 : vector<16x1xi32> to vector<16x128xi32>
    %26 = arith.cmpi eq, %15, %25 : vector<16x128xi32>
    %27 = arith.extui %26 : vector<16x128xi1> to vector<16x128xi32>
    %28 = arith.addi %24, %27 : vector<16x128xi32>
    %29 = vector.broadcast %7 : vector<16x1xi32> to vector<16x128xi32>
    %30 = arith.cmpi eq, %15, %29 : vector<16x128xi32>
    %31 = arith.extui %30 : vector<16x128xi1> to vector<16x128xi32>
    %32 = arith.addi %28, %31 : vector<16x128xi32>
    %33 = vector.broadcast %8 : vector<16x1xi32> to vector<16x128xi32>
    %34 = arith.cmpi eq, %15, %33 : vector<16x128xi32>
    %35 = arith.extui %34 : vector<16x128xi1> to vector<16x128xi32>
    %36 = arith.addi %32, %35 : vector<16x128xi32>
    %37 = vector.broadcast %9 : vector<16x1xi32> to vector<16x128xi32>
    %38 = arith.cmpi eq, %15, %37 : vector<16x128xi32>
    %39 = arith.extui %38 : vector<16x128xi1> to vector<16x128xi32>
    %40 = arith.addi %36, %39 : vector<16x128xi32>
    %41 = arith.sitofp %40 : vector<16x128xi32> to vector<16x128xf32>
    %c0_4 = arith.constant 0 : index
    %c0_5 = arith.constant 0 : index
    %42 = vector.load %arg3[%c0_4, %c0_5] : memref<128x128xf32, #tpu.memory_space<vmem>>, vector<128x128xf32>
    %cst_6 = arith.constant dense<0.000000e+00> : vector<16x128xf32>
    %43 = tpu.matmul %41, %42, %cst_6 {dimension_numbers = #tpu.dot_dimension_numbers<[1], [0], [0], [1], [0, 0, 1, 1], [], []>} : vector<16x128xf32>, vector<128x128xf32>, vector<16x128xf32> -> vector<16x128xf32>
    %44 = arith.addf %12, %43 : vector<16x128xf32>
    %c0_7 = arith.constant 0 : index
    %c0_8 = arith.constant 0 : index
    %45 = vector.load %arg5[%c0_7, %c0_8] : memref<16x128xf32, #tpu.memory_space<vmem>>, vector<16x128xf32>
    %46 = arith.addf %45, %44 : vector<16x128xf32>
    %c0_9 = arith.constant 0 : index
    %c0_10 = arith.constant 0 : index
    %47 = vector.load %arg5[%c0_9, %c0_10] : memref<16x128xf32, #tpu.memory_space<vmem>>, vector<16x128xf32>
    tpu.vector_store %arg5[%c0_9, %c0_10], %46 {strides = array<i32>} : memref<16x128xf32, #tpu.memory_space<vmem>>, vector<16x128xf32>,
    %c2_i32 = arith.constant 2 : i32
    %48 = arith.cmpi eq, %arg1, %c2_i32 : i32
    %49 = arith.extui %48 : i1 to i32
    %c0_i32_11 = arith.constant 0 : i32
    %50 = arith.cmpi ne, %49, %c0_i32_11 : i32
    scf.if %50 {
      %c0_12 = arith.constant 0 : index
      %c0_13 = arith.constant 0 : index
      %51 = vector.load %arg5[%c0_12, %c0_13] : memref<16x128xf32, #tpu.memory_space<vmem>>, vector<16x128xf32>
      %cst_14 = arith.constant 0.166666672 : f32
      %52 = vector.broadcast %cst_14 : f32 to vector<16x128xf32>
      %53 = arith.mulf %51, %52 : vector<16x128xf32>
      %c0_15 = arith.constant 0 : index
      %c0_16 = arith.constant 0 : index
      %54 = vector.load %arg4[%c0_15, %c0_16] : memref<16x128xf32, #tpu.memory_space<vmem>>, vector<16x128xf32>
      tpu.vector_store %arg4[%c0_15, %c0_16], %53 {strides = array<i32>} : memref<16x128xf32, #tpu.memory_space<vmem>>, vector<16x128xf32>,
    } else {
    }
    return
  }
  func.func @transform_0(%arg0: i32, %arg1: i32) -> (i32, i32) {
    %c0_i32 = arith.constant 0 : i32
    %c0_i32_0 = arith.constant 0 : i32
    return %arg0, %c0_i32 : i32, i32
  }
  func.func @transform_1(%arg0: i32, %arg1: i32) -> (i32, i32) {
    %c0_i32 = arith.constant 0 : i32
    %c0_i32_0 = arith.constant 0 : i32
    return %arg1, %c0_i32 : i32, i32
  }
  func.func @transform_2(%arg0: i32, %arg1: i32) -> (i32, i32) {
    %c0_i32 = arith.constant 0 : i32
    %c0_i32_0 = arith.constant 0 : i32
    return %arg0, %c0_i32 : i32, i32
  }
}

</mosaic_0001>

<llo_original>
// kernel: tpu_custom_call.1
$region0: #{tpu_custom_call.1}
  #allocation0 [shape = 'u32[]', space=smem, size = 0x4, offset = 0x4, fixed_abs, tag = 'smem constant byte address 0x4 - core index']
  #allocation1 [shape = 'u32[144,128]{1,0:T(1,128)}', space=vmem, size = 0x12000, scoped, tag = 'internal scratch']
  #allocation2 [shape = 'f32[16,128]{1,0:T(8,128)}', space=vmem, size = 0x2000, scoped, tag = 'scratch operand']
  %s0 = inlined_call_operand.vmem [shape: s32[32,6], index: 0, kind: input, shape index: {}]
  %s1 = inlined_call_operand.hbm [shape: f32[384,128], index: 1, kind: input, shape index: {}]
  %s2 = inlined_call_operand.hbm [shape: f32[32,128], index: 2, kind: output, shape index: {}]
  %s3 = sld [smem:[#allocation0]]
  $region53: #{tpu_custom_call.1} parent=0
    _
  %s5 = ssub.s32 1, %s3
  %s6 = scalar_select 0, %s5, %s3
  $region1: #{tpu_custom_call.1} parent=0
    #allocation3 [shape = 'u8[131072]{0}', space=vmem, size = 0x20000, scoped, tag = 'input window, operand 1']
    #allocation4 [shape = 's32[2]{0}', space=sflag, size = 0x8, scoped, tag = 'scoped memory for tpu_custom_call.1']
    #allocation5 [shape = 's32[2]{0}', space=sflag, size = 0x8, scoped, tag = 'scoped memory for tpu_custom_call.1']
    #allocation6 [shape = 'u8[16384]{0}', space=vmem, size = 0x4000, scoped, tag = 'output window, operand 0']
    %7 = vsyncpa [#allocation4], 0
    %s8 = scalar_lea.sflag [#allocation4], 1
    %9 = vsyncpa %s8, 0
    %10 = vsyncpa [#allocation5], 0
    %s11 = scalar_lea.sflag [#allocation5], 1
    %12 = vsyncpa %s11, 0
    loop: start=0, step=1, limit=8
    $region2: #{tpu_custom_call.1} parent=1 // loop_pre_header
      _
    $region3: #{tpu_custom_call.1} parent=1 // loop_header
      %s14 = sphi 0, %s18
      %p15 = scmp.ge.s32.totalorder %s14, 8
      %s21 = sphi 0, %s33
      %s22 = sphi 0, %s29
      %s23 = sphi 0, %s21
      %s24 = sphi 0, %s22
      %s25 = sphi 0, %s23
      %s26 = sphi 0, %s24
      %s36 = sphi 0, %s38
      %s39 = sphi 0, %s36
      %s40 = sphi 0, %s39
      %s56 = sphi 0, %s40
      %s62 = sphi 0, %s64
      %s65 = sphi 0, %s62
      %s66 = sphi 0, %s65
      %s82 = sphi 0, %s66
      %s88 = sphi 0, %s90
      %s91 = sphi 0, %s88
      %s92 = sphi 0, %s91
      %s108 = sphi 0, %s92
    $region4: #{tpu_custom_call.1} parent=1 // loop_header_branch
      %17 = sbr.rel (%p15) target = $region8
    $region5: #{tpu_custom_call.1} parent=1 // loop_body
      %s19 = ssub.s32 %s14, 1
      %s20 = ssub.s32 %s14, 2
      %s27 = sadd.s32 1, %s22
      %p28 = scmp.ge.s32.totalorder %s27, 3
      %s29 = scalar_select %p28, 0, %s27
      %s30 = sadd.s32 1, %s21
      %s31 = scalar_select %p28, %s30, %s21
      %p32 = scmp.ge.s32.totalorder %s31, 2
      %s33 = scalar_select %p32, 0, %s31
      %s34 = ssub.s32 %s21, %s33
      %p35 = scmp.eq.s32.totalorder %s34, 0
      %s37 = sadd.s32 %s36, 1
      %s38 = scalar_select %p35, %s36, %s37
      %p41 = pneg %p35
      %p42 = scmp.eq.s32.totalorder %s14, 5
      %p43 = por %p41, %p42
      %p44 = scmp.ne.s32.totalorder %s36, %s39
      %p45 = scmp.eq.s32.totalorder %s14, 0
      %p46 = por %p44, %p45
      %p47 = scmp.ne.s32.totalorder %s36, %s39
      %p48 = scmp.eq.s32.totalorder %s19, 5
      %p49 = por %p47, %p48
      %p50 = scmp.ne.s32.totalorder %s39, %s40
      %p51 = scmp.eq.s32.totalorder %s19, 0
      %p52 = por %p50, %p51
      %p53 = scmp.ne.s32.totalorder %s39, %s40
      %p54 = scmp.eq.s32.totalorder %s20, 5
      %p55 = por %p53, %p54
      %p57 = scmp.ne.s32.totalorder %s40, %s56
      %p58 = scmp.eq.s32.totalorder %s20, 0
      %p59 = por %p57, %p58
      %s60 = ssub.s32 %s22, %s29
      %p61 = scmp.eq.s32.totalorder %s60, 0
      %s63 = sadd.s32 %s62, 1
      %s64 = scalar_select %p61, %s62, %s63
      %p67 = pneg %p61
      %p68 = scmp.eq.s32.totalorder %s14, 5
      %p69 = por %p67, %p68
      %p70 = scmp.ne.s32.totalorder %s62, %s65
      %p71 = scmp.eq.s32.totalorder %s14, 0
      %p72 = por %p70, %p71
      %p73 = scmp.ne.s32.totalorder %s62, %s65
      %p74 = scmp.eq.s32.totalorder %s19, 5
      %p75 = por %p73, %p74
      %p76 = scmp.ne.s32.totalorder %s65, %s66
      %p77 = scmp.eq.s32.totalorder %s19, 0
      %p78 = por %p76, %p77
      %p79 = scmp.ne.s32.totalorder %s65, %s66
      %p80 = scmp.eq.s32.totalorder %s20, 5
      %p81 = por %p79, %p80
      %p83 = scmp.ne.s32.totalorder %s66, %s82
      %p84 = scmp.eq.s32.totalorder %s20, 0
      %p85 = por %p83, %p84
      %s86 = ssub.s32 %s21, %s33
      %p87 = scmp.eq.s32.totalorder %s86, 0
      %s89 = sadd.s32 %s88, 1
      %s90 = scalar_select %p87, %s88, %s89
      %p93 = pneg %p87
      %p94 = scmp.eq.s32.totalorder %s14, 5
      %p95 = por %p93, %p94
      %p96 = scmp.ne.s32.totalorder %s88, %s91
      %p97 = scmp.eq.s32.totalorder %s14, 0
      %p98 = por %p96, %p97
      %p99 = scmp.ne.s32.totalorder %s88, %s91
      %p100 = scmp.eq.s32.totalorder %s19, 5
      %p101 = por %p99, %p100
      %p102 = scmp.ne.s32.totalorder %s91, %s92
      %p103 = scmp.eq.s32.totalorder %s19, 0
      %p104 = por %p102, %p103
      %p105 = scmp.ne.s32.totalorder %s91, %s92
      %p106 = scmp.eq.s32.totalorder %s20, 5
      %p107 = por %p105, %p106
      %p109 = scmp.ne.s32.totalorder %s92, %s108
      %p110 = scmp.eq.s32.totalorder %s20, 0
      %p111 = por %p109, %p110
      %p112 = scmp.le.s32.totalorder 1, %s14
      %p113 = scmp.lt.s32.totalorder %s14, 7
      %p114 = pnand %p112, %p113
      %p115 = pneg %p114
      // Predicated region
      $region9: #{tpu_custom_call.1} parent=5 // pred_check
        _
      $region10: #{tpu_custom_call.1} parent=5 // pred_check_branch
        %117 = sbr.rel (%p114) target = $region12
      $region11: #{tpu_custom_call.1} parent=5 // pred_region
        %s118 = ssub.s32 %s14, 1
      $region12: #{tpu_custom_call.1} parent=5 // pred_fallthru
        _
      %p119 = scmp.lt.s32.totalorder %s14, 6
      // Predicated region
      $region13: #{tpu_custom_call.1} parent=5 // pred_check
        %p120 = pneg %p119
      $region14: #{tpu_custom_call.1} parent=5 // pred_check_branch
        %122 = sbr.rel (%p120) target = $region16
      $region15: #{tpu_custom_call.1} parent=5 // pred_region
        // Predicated region
        $region17: #{tpu_custom_call.1} parent=15 // pred_check
          %p123 = pneg %p46
        $region18: #{tpu_custom_call.1} parent=15 // pred_check_branch
          %125 = sbr.rel (%p123) target = $region20
        $region19: #{tpu_custom_call.1} parent=15 // pred_region
          %s126 = smul.u32 2, %s21
          %p127 = scmp.lt.s32.totalorder %s126, 3
          %s128 = scalar_select %p127, %s126, 3
          %s129 = smul.addr %s128, 8
          %s130 = scalar_lea.vmem %s0, %s129
          %s131 = smul.u32 2, %s21
        $region20: #{tpu_custom_call.1} parent=15 // pred_fallthru
          _
        // Predicated region
        $region21: #{tpu_custom_call.1} parent=15 // pred_check
          %p132 = pneg %p72
        $region22: #{tpu_custom_call.1} parent=15 // pred_check_branch
          %134 = sbr.rel (%p132) target = $region24
        $region23: #{tpu_custom_call.1} parent=15 // pred_region
          %s135 = sand.u32 %s62, 1
          %s136 = scalar_lea.sflag [#allocation4], %s135
          %s137 = sand.u32 %s62, 1
          %s138 = smul.addr %s137, 128
          %s139 = scalar_lea.vmem [#allocation3], %s138
          %s140 = smul.u32 16, %s22
          %s142 = ssub.s32 2048, 2048
          %143 = vsyncadd %s136, %s142
          %s144 = smul.addr %s140, 128
          %s145 = scalar_lea.hbm %s1, %s144
          %s146 = sshll.u32 %s139, 4
          %s147 = int_to_ptr.vmem [resolvable:$true] %s146
          %152 = dma.hbm_to_vmem [thread:$0]  %s145, 2048, %s147, %s136, 128, 128, 8
        $region24: #{tpu_custom_call.1} parent=15 // pred_fallthru
          _
      $region16: #{tpu_custom_call.1} parent=5 // pred_fallthru
        _
      %p153 = scmp.le.s32.totalorder 1, %s14
      %p154 = scmp.lt.s32.totalorder %s14, 7
      %p155 = pnand %p153, %p154
      %p156 = pneg %p155
      // Predicated region
      $region25: #{tpu_custom_call.1} parent=5 // pred_check
        _
      $region26: #{tpu_custom_call.1} parent=5 // pred_check_branch
        %158 = sbr.rel (%p155) target = $region28
      $region27: #{tpu_custom_call.1} parent=5 // pred_region
        %s159 = ssub.s32 %s14, 1
        %s160 = sand.u32 %s65, 1
        %s161 = scalar_lea.sflag [#allocation4], %s160
        %s162 = sand.u32 %s65, 1
        %s163 = smul.addr %s162, 128
        %s164 = scalar_lea.vmem [#allocation3], %s163
        // Predicated region
        $region29: #{tpu_custom_call.1} parent=27 // pred_check
          %p165 = pneg %p78
        $region30: #{tpu_custom_call.1} parent=27 // pred_check_branch
          %167 = sbr.rel (%p165) target = $region32
        $region31: #{tpu_custom_call.1} parent=27 // pred_region
          %168 = dma.done %s161, 2048
        $region32: #{tpu_custom_call.1} parent=27 // pred_fallthru
          _
        %s169 = smul.u32 2, %s23
        %p170 = scmp.lt.s32.totalorder %s169, 3
        %s171 = scalar_select %p170, %s169, 3
        %s172 = smul.addr %s171, 8
        %s173 = scalar_lea.vmem %s0, %s172
        %p174 = pneg %p52
        %p175 = pneg %p49
        %s176 = sand.u32 %s65, 1
        %s177 = scalar_lea.sflag [#allocation4], %s176
        %s178 = sand.u32 %s65, 1
        %s179 = smul.addr %s178, 128
        %s180 = scalar_lea.vmem [#allocation3], %s179
        %p181 = pneg %p78
        %p182 = pneg %p75
        %p183 = pneg %p104
        %p184 = pneg %p101
        %s185 = sand.u32 %s91, 1
        %s186 = scalar_lea.sflag [#allocation5], %s185
        %s187 = sand.u32 %s91, 1
        %s188 = smul.addr %s187, 16
        %s189 = scalar_lea.vmem [#allocation6], %s188
        %s190 = smul.u32 2, %s23
        %p191 = scmp.lt.s32.totalorder %s190, 3
        %s192 = scalar_select %p191, %s190, 3
        %s193 = smul.addr %s192, 8
        %s194 = scalar_lea.vmem %s0, %s193
        %s195 = smul.u32 2, %s23
        %s196 = smul.u32 16, %s24
        %s197 = smul.u32 2, %s23
        %p198 = scmp.eq.s32.totalorder %s24, 0
        // Predicated region
        $region33: #{tpu_custom_call.1} parent=27 // pred_check
          %p199 = pneg %p198
        $region34: #{tpu_custom_call.1} parent=27 // pred_check_branch
          %201 = sbr.rel (%p199) target = $region36
        $region35: #{tpu_custom_call.1} parent=27 // pred_region
          %202 = vst [vmem:[#allocation2] sm:$0xff] 0.0
          %203 = vst [vmem:[#allocation2 + $0x8] sm:$0xff] 0.0
        $region36: #{tpu_custom_call.1} parent=27 // pred_fallthru
          _
        %v204 = vld [vmem:[%s194] sm:$0xff]
        %v205 = vld [vmem:[%s194 + $0x8] sm:$0xff]
        %s206 = smul.u32 %s24, 128
        %v207 = vlaneseq
        %v208 = vand.u32 %v207, 127
        %v209 = vstv %s206
        %v210 = vadd.s32 %v208, %v209
        %211 = vset.pattern.permute.xlu0 0
        %212 = vperm.xlu0 %211, %v204
        %v213 = vpop.permute.xlu0 %212
        %214 = vset.pattern.permute.xlu0 0
        %215 = vperm.xlu0 %214, %v205
        %v216 = vpop.permute.xlu0 %215
        %vm217 = vcmp.eq.s32.totalorder %v210, %v213
        %vm218 = vcmp.eq.s32.totalorder %v210, %v216
        %v219 = vsel %vm217, 1, 0
        %v220 = vsel %vm218, 1, 0
        %221 = vset.pattern.permute.xlu0 1
        %222 = vperm.xlu0 %221, %v204
        %v223 = vpop.permute.xlu0 %222
        %224 = vset.pattern.permute.xlu0 1
        %225 = vperm.xlu0 %224, %v205
        %v226 = vpop.permute.xlu0 %225
        %vm227 = vcmp.eq.s32.totalorder %v210, %v223
        %vm228 = vcmp.eq.s32.totalorder %v210, %v226
        %v229 = vsel %vm227, 1, 0
        %v230 = vsel %vm228, 1, 0
        %v231 = vadd.s32 %v219, %v229
        %v232 = vadd.s32 %v220, %v230
        %233 = vset.pattern.permute.xlu0 2
        %234 = vperm.xlu0 %233, %v204
        %v235 = vpop.permute.xlu0 %234
        %236 = vset.pattern.permute.xlu0 2
        %237 = vperm.xlu0 %236, %v205
        %v238 = vpop.permute.xlu0 %237
        %vm239 = vcmp.eq.s32.totalorder %v210, %v235
        %vm240 = vcmp.eq.s32.totalorder %v210, %v238
        %v241 = vsel %vm239, 1, 0
        %v242 = vsel %vm240, 1, 0
        %v243 = vadd.s32 %v231, %v241
        %v244 = vadd.s32 %v232, %v242
        %245 = vset.pattern.permute.xlu0 3
        %246 = vperm.xlu0 %245, %v204
        %v247 = vpop.permute.xlu0 %246
        %248 = vset.pattern.permute.xlu0 3
        %249 = vperm.xlu0 %248, %v205
        %v250 = vpop.permute.xlu0 %249
        %vm251 = vcmp.eq.s32.totalorder %v210, %v247
        %vm252 = vcmp.eq.s32.totalorder %v210, %v250
        %v253 = vsel %vm251, 1, 0
        %v254 = vsel %vm252, 1, 0
        %v255 = vadd.s32 %v243, %v253
        %v256 = vadd.s32 %v244, %v254
        %257 = vset.pattern.permute.xlu0 4
        %258 = vperm.xlu0 %257, %v204
        %v259 = vpop.permute.xlu0 %258
        %260 = vset.pattern.permute.xlu0 4
        %261 = vperm.xlu0 %260, %v205
        %v262 = vpop.permute.xlu0 %261
        %vm263 = vcmp.eq.s32.totalorder %v210, %v259
        %vm264 = vcmp.eq.s32.totalorder %v210, %v262
        %v265 = vsel %vm263, 1, 0
        %v266 = vsel %vm264, 1, 0
        %v267 = vadd.s32 %v255, %v265
        %v268 = vadd.s32 %v256, %v266
        %269 = vset.pattern.permute.xlu0 5
        %270 = vperm.xlu0 %269, %v204
        %v271 = vpop.permute.xlu0 %270
        %272 = vset.pattern.permute.xlu0 5
        %273 = vperm.xlu0 %272, %v205
        %v274 = vpop.permute.xlu0 %273
        %vm275 = vcmp.eq.s32.totalorder %v210, %v271
        %vm276 = vcmp.eq.s32.totalorder %v210, %v274
        %v277 = vsel %vm275, 1, 0
        %v278 = vsel %vm276, 1, 0
        %v279 = vadd.s32 %v267, %v277
        %v280 = vadd.s32 %v268, %v278
        %v281 = vcvt.s32.f32 %v279
        %v282 = vcvt.s32.f32 %v280
        %v283 = vld [vmem:[%s164] sm:$0xff]
        %v284 = vld [vmem:[%s164 + $0x8] sm:$0xff]
        %v285 = vld [vmem:[%s164 + $0x10] sm:$0xff]
        %v286 = vld [vmem:[%s164 + $0x18] sm:$0xff]
        %v287 = vld [vmem:[%s164 + $0x20] sm:$0xff]
        %v288 = vld [vmem:[%s164 + $0x28] sm:$0xff]
        %v289 = vld [vmem:[%s164 + $0x30] sm:$0xff]
        %v290 = vld [vmem:[%s164 + $0x38] sm:$0xff]
        %v291 = vld [vmem:[%s164 + $0x40] sm:$0xff]
        %v292 = vld [vmem:[%s164 + $0x48] sm:$0xff]
        %v293 = vld [vmem:[%s164 + $0x50] sm:$0xff]
        %v294 = vld [vmem:[%s164 + $0x58] sm:$0xff]
        %v295 = vld [vmem:[%s164 + $0x60] sm:$0xff]
        %v296 = vld [vmem:[%s164 + $0x68] sm:$0xff]
        %v297 = vld [vmem:[%s164 + $0x70] sm:$0xff]
        %v298 = vld [vmem:[%s164 + $0x78] sm:$0xff]
        %299 = vmatprep.subr.mxu0 0.0
        %300 = vmatpush1.msra.mxu0 %v298
        %301 = vmatprep.subr.mxu0 0.0
        %302 = vmatpush1.msra.mxu0 %v297
        %303 = vmatprep.subr.mxu0 0.0
        %304 = vmatpush1.msra.mxu0 %v296
        %305 = vmatprep.subr.mxu0 0.0
        %306 = vmatpush1.msra.mxu0 %v295
        %307 = vmatprep.subr.mxu0 0.0
        %308 = vmatpush1.msra.mxu0 %v294
        %309 = vmatprep.subr.mxu0 0.0
        %310 = vmatpush1.msra.mxu0 %v293
        %311 = vmatprep.subr.mxu0 0.0
        %312 = vmatpush1.msra.mxu0 %v292
        %313 = vmatprep.subr.mxu0 0.0
        %314 = vmatpush1.msra.mxu0 %v291
        %315 = vmatprep.subr.mxu0 0.0
        %316 = vmatpush1.msra.mxu0 %v290
        %317 = vmatprep.subr.mxu0 0.0
        %318 = vmatpush1.msra.mxu0 %v289
        %319 = vmatprep.subr.mxu0 0.0
        %320 = vmatpush1.msra.mxu0 %v288
        %321 = vmatprep.subr.mxu0 0.0
        %322 = vmatpush1.msra.mxu0 %v287
        %323 = vmatprep.subr.mxu0 0.0
        %324 = vmatpush1.msra.mxu0 %v286
        %325 = vmatprep.subr.mxu0 0.0
        %326 = vmatpush1.msra.mxu0 %v285
        %327 = vmatprep.subr.mxu0 0.0
        %328 = vmatpush1.msra.mxu0 %v284
        %329 = vmatprep.subr.mxu0 0.0
        %330 = vmatpush1.msra.mxu0 %v283
        %331 = vmatprep.subr.mxu0 0.0
        %332 = vmatpush2.msra.mxu0 0.0
        %333 = vmatprep.subr.mxu0 0.0
        %334 = vmatpush2.msra.mxu0 0.0
        %335 = vmatprep.subr.mxu0 0.0
        %336 = vmatpush2.msra.mxu0 0.0
        %337 = vmatprep.subr.mxu0 0.0
        %338 = vmatpush2.msra.mxu0 0.0
        %339 = vmatprep.subr.mxu0 0.0
        %340 = vmatpush2.msra.mxu0 0.0
        %341 = vmatprep.subr.mxu0 0.0
        %342 = vmatpush2.msra.mxu0 0.0
        %343 = vmatprep.subr.mxu0 0.0
        %344 = vmatpush2.msra.mxu0 0.0
        %345 = vmatprep.subr.mxu0 0.0
        %346 = vmatpush2.msra.mxu0 0.0
        %347 = vmatprep.subr.mxu0 0.0
        %348 = vmatpush2.msra.mxu0 0.0
        %349 = vmatprep.subr.mxu0 0.0
        %350 = vmatpush2.msra.mxu0 0.0
        %351 = vmatprep.subr.mxu0 0.0
        %352 = vmatpush2.msra.mxu0 0.0
        %353 = vmatprep.subr.mxu0 0.0
        %354 = vmatpush2.msra.mxu0 0.0
        %355 = vmatprep.subr.mxu0 0.0
        %356 = vmatpush2.msra.mxu0 0.0
        %357 = vmatprep.subr.mxu0 0.0
        %358 = vmatpush2.msra.mxu0 0.0
        %359 = vmatprep.subr.mxu0 0.0
        %360 = vmatpush2.msra.mxu0 0.0
        %361 = vmatprep.subr.mxu0 0.0
        %362 = vmatpush2.msra.mxu0 0.0
        %363 = vmatprep.mubr.f32.mxu0 0.0
        %364 = vmatmul.mubr.f32.gmra.mxu0 %v281
        %v365 = vpop.f32.mrf.mxu0
        %v366 = vadd.f32 0.0, %v365
        %v367 = vpop.f32.mrf.mxu0
        %368 = vmatprep.mubr.f32.mxu0 0.0
        %369 = vmatmul.mubr.f32.gmra.mxu0 %v282
        %v370 = vpop.f32.mrf.mxu0
        %v371 = vadd.f32 0.0, %v370
        %v372 = vpop.f32.mrf.mxu0
        %373 = vdwg.mxu0
        %v374 = vld [vmem:[#allocation2] sm:$0xff]
        %v375 = vld [vmem:[#allocation2 + $0x8] sm:$0xff]
        %v376 = vadd.f32 %v374, %v366
        %v377 = vadd.f32 %v375, %v371
        %378 = vst [vmem:[#allocation2] sm:$0xff] %v376
        %379 = vst [vmem:[#allocation2 + $0x8] sm:$0xff] %v377
        %p380 = scmp.eq.s32.totalorder %s24, 2
        // Predicated region
        $region37: #{tpu_custom_call.1} parent=27 // pred_check
          %p381 = pneg %p380
        $region38: #{tpu_custom_call.1} parent=27 // pred_check_branch
          %383 = sbr.rel (%p381) target = $region40
        $region39: #{tpu_custom_call.1} parent=27 // pred_region
          %v384 = vld [vmem:[#allocation2] sm:$0xff]
          %v385 = vld [vmem:[#allocation2 + $0x8] sm:$0xff]
          %v386 = vmul.f32 %v384, 0.16666667
          %v387 = vmul.f32 %v385, 0.16666667
          %388 = vst [vmem:[%s189] sm:$0xff] %v386
          %389 = vst [vmem:[%s189 + $0x8] sm:$0xff] %v387
        $region40: #{tpu_custom_call.1} parent=27 // pred_fallthru
          _
        %s390 = sand.u32 %s91, 1
        %s391 = scalar_lea.sflag [#allocation5], %s390
        %s392 = sand.u32 %s91, 1
        %s393 = smul.addr %s392, 16
        %s394 = scalar_lea.vmem [#allocation6], %s393
        // Predicated region
        $region41: #{tpu_custom_call.1} parent=27 // pred_check
          %p395 = pneg %p101
        $region42: #{tpu_custom_call.1} parent=27 // pred_check_branch
          %397 = sbr.rel (%p395) target = $region44
        $region43: #{tpu_custom_call.1} parent=27 // pred_region
          %s398 = smul.u32 2, %s23
          %s400 = ssub.s32 256, 256
          %401 = vsyncadd %s391, %s400
          %s402 = smul.addr %s398, 128
          %s403 = scalar_lea.hbm %s2, %s402
          %s404 = sshll.u32 %s394, 4
          %s405 = int_to_ptr.vmem [resolvable:$true] %s404
          %410 = dma.vmem_to_hbm [thread:$0]  %s405, 256, %s403, %s391, 128, 128, 8
        $region44: #{tpu_custom_call.1} parent=27 // pred_fallthru
          _
      $region28: #{tpu_custom_call.1} parent=5 // pred_fallthru
        _
      %p411 = scmp.le.s32.totalorder 2, %s14
      // Predicated region
      $region45: #{tpu_custom_call.1} parent=5 // pred_check
        %p412 = pneg %p411
      $region46: #{tpu_custom_call.1} parent=5 // pred_check_branch
        %414 = sbr.rel (%p412) target = $region48
      $region47: #{tpu_custom_call.1} parent=5 // pred_region
        %s415 = ssub.s32 %s14, 2
        // Predicated region
        $region49: #{tpu_custom_call.1} parent=47 // pred_check
          %p416 = pneg %p107
        $region50: #{tpu_custom_call.1} parent=47 // pred_check_branch
          %418 = sbr.rel (%p416) target = $region52
        $region51: #{tpu_custom_call.1} parent=47 // pred_region
          %s419 = sand.u32 %s92, 1
          %s420 = scalar_lea.sflag [#allocation5], %s419
          %s421 = sand.u32 %s92, 1
          %s422 = smul.addr %s421, 16
          %s423 = scalar_lea.vmem [#allocation6], %s422
          %424 = dma.done %s420, 256
        $region52: #{tpu_custom_call.1} parent=47 // pred_fallthru
          _
      $region48: #{tpu_custom_call.1} parent=5 // pred_fallthru
        _
    $region6: #{tpu_custom_call.1} parent=1 // loop_footer
      %s18 = sadd.s32 1, %s14
    $region7: #{tpu_custom_call.1} parent=1 // loop_footer_branch
      %13 = sbr.rel target = $region3
    $region8: #{tpu_custom_call.1} parent=1 // loop_exit
      _
    %425 = vsyncpa [#allocation4], 1
    %s426 = scalar_lea.sflag [#allocation4], 1
    %427 = vsyncpa %s426, 1
    %428 = vsyncpa [#allocation5], 1
    %s429 = scalar_lea.sflag [#allocation5], 1
    %430 = vsyncpa %s429, 1

</llo_original>
